<compile_context>
chip_gen: v6e
topology: v6e:2x2x1
jax: 0.10.0
libtpu: 0.0.40
codegen_flags: <defaults>
</compile_context>

<pallas_src>
import jax
import jax.numpy as jnp
from jax.experimental import pallas as pl
from jax.experimental.pallas import tpu as pltpu


# ----------------------------------------------------------------------------
# helpers
# ----------------------------------------------------------------------------
def _cdiv(a, b):
    return -(-a // b)


def _round_up(x, m):
    return _cdiv(x, m) * m


def _balanced_tile(dim, tile_max, align):
    """Largest tile <= tile_max (a multiple of `align`) that splits `dim` evenly-ish."""
    dim_al = _round_up(max(dim, 1), align)
    if dim_al <= tile_max:
        return dim_al
    n_tiles = _cdiv(dim_al, tile_max)
    return _round_up(_cdiv(dim_al, n_tiles), align)


def _hw_config():
    """Generation-aware tile caps / VMEM budget (v5e/v6e: 128 MiB, v7x: 64 MiB/TC)."""
    try:
        vmem = int(pltpu.get_tpu_info().vmem_capacity_bytes)
    except Exception:
        vmem = 64 * 1024 * 1024  # conservative (v7x-sized) fallback
    if vmem >= 100 * 1024 * 1024:
        # v5e / v6e: big VMEM, single TensorCore per chip.
        return dict(tm_max=512, tn_max=1024, tk_max=1024,
                    vmem_limit=96 * 1024 * 1024, two_cores=False)
    # v7x-class: 64 MiB VMEM per TensorCore, 2 TCs/chip.
    return dict(tm_max=256, tn_max=1024, tk_max=512,
                vmem_limit=48 * 1024 * 1024, two_cores=True)


# ----------------------------------------------------------------------------
# kernels
# ----------------------------------------------------------------------------
def _slp_kernel_single(x_ref, w_ref, o_ref):
    """Single K step: write the dot straight to the output tile (no scratch).

    x_ref: (tm, tk)  activation tile (cast to the weight dtype in-kernel)
    w_ref: (tk, tn)  pre-transposed weight tile, K on sublanes, D_out on lanes
    o_ref: (tm, tn)  lane-dense output tile
    """
    x = x_ref[...].astype(w_ref.dtype)
    o_ref[...] = jax.lax.dot_general(
        x, w_ref[...],
        dimension_numbers=(((1,), (0,)), ((), ())),
        preferred_element_type=jnp.float32,
    ).astype(o_ref.dtype)


def _slp_kernel_acc(x_ref, w_ref, o_ref, acc_ref):
    """Multi K step: f32 VMEM accumulator resident across the (innermost) K axis."""
    k = pl.program_id(2)
    x = x_ref[...].astype(w_ref.dtype)
    part = jax.lax.dot_general(
        x, w_ref[...],
        dimension_numbers=(((1,), (0,)), ((), ())),
        preferred_element_type=jnp.float32,
    )

    @pl.when(k == 0)
    def _():
        acc_ref[...] = part          # direct store: no zero-fill + extra add

    @pl.when(k != 0)
    def _():
        acc_ref[...] += part

    @pl.when(k == pl.num_programs(2) - 1)
    def _():
        o_ref[...] = acc_ref[...].astype(o_ref.dtype)


# ----------------------------------------------------------------------------
# module-equivalent wrapper
# ----------------------------------------------------------------------------
class SLPNetPallas:
    """Pallas-TPU equivalent of SLPNet.forward: y = x @ weight.T (bias-free Linear)."""

    def __init__(self, weight, *, compute_dtype=None):
        """weight: (D_out, D_in) in PyTorch nn.Linear layout (prepared once here)."""
        D_out, D_in = weight.shape
        self.d_in, self.d_out = D_in, D_out
        self.cfg = _hw_config()
        self.compute_dtype = (weight.dtype if compute_dtype is None
                              else jnp.dtype(compute_dtype))

        tk = _balanced_tile(D_in, self.cfg["tk_max"], 128)
        tn = _balanced_tile(D_out, self.cfg["tn_max"], 128)
        k_pad = _round_up(D_in, tk)
        n_pad = _round_up(D_out, tn)

        # v7x megacore: make sure at least one "parallel" grid axis has extent >= 2
        # for problems big enough to matter (split the N tile in half).
        if (self.cfg["two_cores"] and n_pad // tn == 1
                and n_pad >= 256 and (n_pad // 2) % 128 == 0):
            tn = n_pad // 2

        self.tk, self.tn = tk, tn
        self.k_pad, self.n_pad = k_pad, n_pad

        # One-time weight prep: transpose -> (D_in, D_out), cast, zero-pad.
        w_t = weight.T.astype(self.compute_dtype)
        if (k_pad, n_pad) != (D_in, D_out):
            w_t = jnp.pad(w_t, ((0, k_pad - D_in), (0, n_pad - D_out)))
        self.w = jax.device_put(w_t)

    def __call__(self, x, *, tiny_fallback=True):
        orig_shape = x.shape
        assert orig_shape[-1] == self.d_in, "feature-size mismatch"
        x2d = x.reshape(-1, self.d_in)
        B = x2d.shape[0]
        out_dtype = x.dtype

        # Tiny-problem path: pallas_call fixed overhead would dominate a few-KFLOP
        # matmul, so let XLA fuse it into the surrounding graph.
        if tiny_fallback and B * self.d_in * self.d_out < (1 << 21):
            out = jax.lax.dot_general(
                x2d.astype(self.compute_dtype),
                self.w[:self.d_in, :self.d_out],
                dimension_numbers=(((1,), (0,)), ((), ())),
                preferred_element_type=jnp.float32,
            ).astype(out_dtype)
            return out.reshape(*orig_shape[:-1], self.d_out)

        tm = _balanced_tile(B, self.cfg["tm_max"], 16)
        b_pad = _round_up(B, tm)
        grid_m = b_pad // tm
        grid_n = self.n_pad // self.tn
        grid_k = self.k_pad // self.tk

        x_p = x2d
        if (b_pad, self.k_pad) != (B, self.d_in):
            x_p = jnp.pad(x2d, ((0, b_pad - B), (0, self.k_pad - self.d_in)))

        tk, tn = self.tk, self.tn
        vmem_limit = self.cfg["vmem_limit"]

        if grid_k == 1:
            out = pl.pallas_call(
                _slp_kernel_single,
                out_shape=jax.ShapeDtypeStruct((b_pad, self.n_pad), out_dtype),
                grid_spec=pltpu.PrefetchScalarGridSpec(
                    num_scalar_prefetch=0,
                    grid=(grid_m, grid_n),
                    in_specs=[
                        pl.BlockSpec((tm, tk), lambda i, j: (i, 0)),   # x tile
                        pl.BlockSpec((tk, tn), lambda i, j: (0, j)),   # W.T tile
                    ],
                    out_specs=pl.BlockSpec((tm, tn), lambda i, j: (i, j)),
                ),
                compiler_params=pltpu.CompilerParams(
                    dimension_semantics=("parallel", "parallel"),
                    vmem_limit_bytes=vmem_limit,
                ),
            )(x_p, self.w)
        else:
            out = pl.pallas_call(
                _slp_kernel_acc,
                out_shape=jax.ShapeDtypeStruct((b_pad, self.n_pad), out_dtype),
                grid_spec=pltpu.PrefetchScalarGridSpec(
                    num_scalar_prefetch=0,
                    grid=(grid_m, grid_n, grid_k),
                    in_specs=[
                        pl.BlockSpec((tm, tk), lambda i, j, k: (i, k)),  # x tile
                        pl.BlockSpec((tk, tn), lambda i, j, k: (k, j)),  # W.T tile
                    ],
                    out_specs=pl.BlockSpec((tm, tn), lambda i, j, k: (i, j)),
                    scratch_shapes=[pltpu.VMEM((tm, tn), jnp.float32)],
                ),
                compiler_params=pltpu.CompilerParams(
                    dimension_semantics=("parallel", "parallel", "arbitrary"),
                    vmem_limit_bytes=vmem_limit,
                ),
            )(x_p, self.w)

        if (b_pad, self.n_pad) != (B, self.d_out):
            out = out[:B, :self.d_out]
        return out.reshape(*orig_shape[:-1], self.d_out)


# TODO(synk): fp8-weight path for v7x (offline-quantized weights, f32 accumulation)
# is intentionally not implemented — it changes numerics and is opt-in hardware-specific.


if __name__ == "__main__":
    key = jax.random.PRNGKey(0)
    k_x, k_w, k_x2, k_w2 = jax.random.split(key, 4)

    # knock76 deployment shape: SLPNet(300, 4), small batch of feature vectors.
    B, D_in, D_out = 8, 300, 4
    x = jax.random.normal(k_x, (B, D_in), dtype=jnp.float32)
    weight = jax.random.normal(k_w, (D_out, D_in), dtype=jnp.float32)  # nn.init.normal_

    model = SLPNetPallas(weight)                 # one-time weight prep (f32 operands)
    ref = x @ weight.T

    # Default tiny-shape path: matmul left to XLA (no pallas_call overhead).
    out_fused = jax.block_until_ready(model(x))
    assert out_fused.shape == (B, D_out)
    assert jnp.allclose(out_fused, ref, atol=1e-3, rtol=1e-3), "fused path mismatch"

    # Force the Pallas kernel: single-K-step kernel, no accumulator scratch.
    out_pallas = jax.block_until_ready(model(x, tiny_fallback=False))
    assert jnp.allclose(out_pallas, ref, atol=1e-3, rtol=1e-3), "pallas f32 mismatch"

    # bf16-operand / f32-accumulate path (in-kernel activation cast, pre-cast weight).
    model_bf16 = SLPNetPallas(weight, compute_dtype=jnp.bfloat16)
    out_bf16 = jax.block_until_ready(model_bf16(x, tiny_fallback=False))
    ref_bf16 = (x.astype(jnp.bfloat16).astype(jnp.float32)
                @ weight.astype(jnp.bfloat16).astype(jnp.float32).T)
    assert jnp.allclose(out_bf16, ref_bf16, atol=2e-2, rtol=2e-2), "pallas bf16 mismatch"

    # Larger shape: exercises balanced M tiling, multi-K accumulator kernel and
    # (on v7x) the two-TensorCore N split.
    B2, D_in2, D_out2 = 640, 2048, 768
    x2 = jax.random.normal(k_x2, (B2, D_in2), dtype=jnp.float32)
    w2 = jax.random.normal(k_w2, (D_out2, D_in2), dtype=jnp.float32)
    model2 = SLPNetPallas(w2)
    out2 = jax.block_until_ready(model2(x2))
    ref2 = jnp.matmul(x2, w2.T, precision=jax.lax.Precision.HIGHEST)
    assert out2.shape == (B2, D_out2)
    assert jnp.allclose(out2, ref2, atol=2e-2, rtol=2e-2), "tiled path mismatch"

    print("KERNEL_OK")
</pallas_src>

<mosaic_0001>
module attributes {stable_mosaic.version = 11 : i64} {
  func.func @_slp_kernel_single(%arg0: i32, %arg1: i32, %arg2: memref<16x384xf32, #tpu.memory_space<vmem>>, %arg3: memref<384x128xf32, #tpu.memory_space<vmem>>, %arg4: memref<16x128xf32, #tpu.memory_space<vmem>>) attributes {dimension_semantics = [#tpu.dimension_semantics<parallel>, #tpu.dimension_semantics<parallel>], iteration_bounds = array<i64: 1, 1>, scalar_prefetch = 0 : i64, scratch_operands = 0 : i64, tpu.core_type = #tpu.core_type<tc>, window_params = [{transform_indices = @transform_0, window_bounds = array<i64: 16, 384>}, {transform_indices = @transform_1, window_bounds = array<i64: 384, 128>}, {transform_indices = @transform_2, window_bounds = array<i64: 16, 128>}]} {
    %c0 = arith.constant 0 : index
    %c0_0 = arith.constant 0 : index
    %0 = vector.load %arg2[%c0, %c0_0] : memref<16x384xf32, #tpu.memory_space<vmem>>, vector<16x384xf32>
    %c0_1 = arith.constant 0 : index
    %c0_2 = arith.constant 0 : index
    %1 = vector.load %arg3[%c0_1, %c0_2] : memref<384x128xf32, #tpu.memory_space<vmem>>, vector<384x128xf32>
    %cst = arith.constant dense<0.000000e+00> : vector<16x128xf32>
    %2 = tpu.matmul %0, %1, %cst {dimension_numbers = #tpu.dot_dimension_numbers<[1], [0], [0], [1], [0, 0, 1, 1], [], []>} : vector<16x384xf32>, vector<384x128xf32>, vector<16x128xf32> -> vector<16x128xf32>
    %c0_3 = arith.constant 0 : index
    %c0_4 = arith.constant 0 : index
    %3 = vector.load %arg4[%c0_3, %c0_4] : memref<16x128xf32, #tpu.memory_space<vmem>>, vector<16x128xf32>
    tpu.vector_store %arg4[%c0_3, %c0_4], %2 {strides = array<i32>} : memref<16x128xf32, #tpu.memory_space<vmem>>, vector<16x128xf32>,
    return
  }
  func.func @transform_0(%arg0: i32, %arg1: i32) -> (i32, i32) {
    %c0_i32 = arith.constant 0 : i32
    %c0_i32_0 = arith.constant 0 : i32
    return %arg0, %c0_i32 : i32, i32
  }
  func.func @transform_1(%arg0: i32, %arg1: i32) -> (i32, i32) {
    %c0_i32 = arith.constant 0 : i32
    %c0_i32_0 = arith.constant 0 : i32
    return %c0_i32, %arg1 : i32, i32
  }
  func.func @transform_2(%arg0: i32, %arg1: i32) -> (i32, i32) {
    %c0_i32 = arith.constant 0 : i32
    return %arg0, %arg1 : i32, i32
  }
}

</mosaic_0001>

<llo_original>
// kernel: tpu_custom_call.1
$region0: #{tpu_custom_call.1}
  #allocation0 [shape = 'u32[]', space=smem, size = 0x4, offset = 0x4, fixed_abs, tag = 'smem constant byte address 0x4 - core index']
  #allocation1 [shape = 'u32[144,128]{1,0:T(1,128)}', space=vmem, size = 0x12000, scoped, tag = 'internal scratch']
  %s0 = inlined_call_operand.hbm [shape: f32[16,384], index: 0, kind: input, shape index: {}]
  %s1 = inlined_call_operand.hbm [shape: f32[384,128], index: 1, kind: input, shape index: {}]
  %s2 = inlined_call_operand.hbm [shape: f32[16,128], index: 2, kind: output, shape index: {}]
  %s3 = sld [smem:[#allocation0]]
  $region26: #{tpu_custom_call.1} parent=0
    _
  %s5 = ssub.s32 1, %s3
  %s6 = scalar_select 0, %s5, %s3
  $region1: #{tpu_custom_call.1} parent=0
    #allocation2 [shape = 'u8[24576]{0}', space=vmem, size = 0x6000, scoped, tag = 'input window, operand 0, single buffered']
    #allocation3 [shape = 's32[1]{0}', space=sflag, size = 0x4, scoped, tag = 'scoped memory for tpu_custom_call.1']
    #allocation4 [shape = 's32[1]{0}', space=sflag, size = 0x4, scoped, tag = 'scoped memory for tpu_custom_call.1']
    #allocation5 [shape = 'u8[196608]{0}', space=vmem, size = 0x30000, scoped, tag = 'input window, operand 1, single buffered']
    #allocation6 [shape = 's32[1]{0}', space=sflag, size = 0x4, scoped, tag = 'scoped memory for tpu_custom_call.1']
    #allocation7 [shape = 'u8[8192]{0}', space=vmem, size = 0x2000, scoped, tag = 'output window, operand 0, single buffered']
    %7 = vsyncpa [#allocation3], 0
    %8 = vsyncpa [#allocation6], 0
    %9 = vsyncpa [#allocation4], 0
    // Predicated region
    $region2: #{tpu_custom_call.1} parent=1 // pred_check
      _
    $region3: #{tpu_custom_call.1} parent=1 // pred_check_branch
      %11 = sbr.rel (0) target = $region5
    $region4: #{tpu_custom_call.1} parent=1 // pred_region
      %s13 = ssub.s32 768, 768
      %14 = vsyncadd [#allocation3], %s13
      %s15 = sshll.u32 [#allocation2], 4
      %s16 = int_to_ptr.vmem [resolvable:$true] %s15
      %21 = dma.hbm_to_vmem [thread:$0]  %s0, 768, %s16, [#allocation3], 384, 384, 24
    $region5: #{tpu_custom_call.1} parent=1 // pred_fallthru
      _
    // Predicated region
    $region6: #{tpu_custom_call.1} parent=1 // pred_check
      _
    $region7: #{tpu_custom_call.1} parent=1 // pred_check_branch
      %23 = sbr.rel (0) target = $region9
    $region8: #{tpu_custom_call.1} parent=1 // pred_region
      %s25 = ssub.s32 6144, 6144
      %26 = vsyncadd [#allocation6], %s25
      %s27 = sshll.u32 [#allocation5], 4
      %s28 = int_to_ptr.vmem [resolvable:$true] %s27
      %33 = dma.hbm_to_vmem [thread:$0]  %s1, 6144, %s28, [#allocation6], 128, 128, 8
    $region9: #{tpu_custom_call.1} parent=1 // pred_fallthru
      _
    // Predicated region
    $region10: #{tpu_custom_call.1} parent=1 // pred_check
      _
    $region11: #{tpu_custom_call.1} parent=1 // pred_check_branch
      %35 = sbr.rel (0) target = $region13
    $region12: #{tpu_custom_call.1} parent=1 // pred_region
      %36 = dma.done [#allocation3], 768
    $region13: #{tpu_custom_call.1} parent=1 // pred_fallthru
      _
    // Predicated region
    $region14: #{tpu_custom_call.1} parent=1 // pred_check
      _
    $region15: #{tpu_custom_call.1} parent=1 // pred_check_branch
      %38 = sbr.rel (0) target = $region17
    $region16: #{tpu_custom_call.1} parent=1 // pred_region
      %39 = dma.done [#allocation6], 6144
    $region17: #{tpu_custom_call.1} parent=1 // pred_fallthru
      _
    %v40 = vld [vmem:[#allocation2] sm:$0xff]
    %v41 = vld [vmem:[#allocation2 + $0x8] sm:$0xff]
    %v42 = vld [vmem:[#allocation2 + $0x10] sm:$0xff]
    %v43 = vld [vmem:[#allocation2 + $0x18] sm:$0xff]
    %v44 = vld [vmem:[#allocation2 + $0x20] sm:$0xff]
    %v45 = vld [vmem:[#allocation2 + $0x28] sm:$0xff]
    %v46 = vld [vmem:[#allocation5] sm:$0xff]
    %v47 = vld [vmem:[#allocation5 + $0x8] sm:$0xff]
    %v48 = vld [vmem:[#allocation5 + $0x10] sm:$0xff]
    %v49 = vld [vmem:[#allocation5 + $0x18] sm:$0xff]
    %v50 = vld [vmem:[#allocation5 + $0x20] sm:$0xff]
    %v51 = vld [vmem:[#allocation5 + $0x28] sm:$0xff]
    %v52 = vld [vmem:[#allocation5 + $0x30] sm:$0xff]
    %v53 = vld [vmem:[#allocation5 + $0x38] sm:$0xff]
    %v54 = vld [vmem:[#allocation5 + $0x40] sm:$0xff]
    %v55 = vld [vmem:[#allocation5 + $0x48] sm:$0xff]
    %v56 = vld [vmem:[#allocation5 + $0x50] sm:$0xff]
    %v57 = vld [vmem:[#allocation5 + $0x58] sm:$0xff]
    %v58 = vld [vmem:[#allocation5 + $0x60] sm:$0xff]
    %v59 = vld [vmem:[#allocation5 + $0x68] sm:$0xff]
    %v60 = vld [vmem:[#allocation5 + $0x70] sm:$0xff]
    %v61 = vld [vmem:[#allocation5 + $0x78] sm:$0xff]
    %v62 = vld [vmem:[#allocation5 + $0x80] sm:$0xff]
    %v63 = vld [vmem:[#allocation5 + $0x88] sm:$0xff]
    %v64 = vld [vmem:[#allocation5 + $0x90] sm:$0xff]
    %v65 = vld [vmem:[#allocation5 + $0x98] sm:$0xff]
    %v66 = vld [vmem:[#allocation5 + $0xa0] sm:$0xff]
    %v67 = vld [vmem:[#allocation5 + $0xa8] sm:$0xff]
    %v68 = vld [vmem:[#allocation5 + $0xb0] sm:$0xff]
    %v69 = vld [vmem:[#allocation5 + $0xb8] sm:$0xff]
    %v70 = vld [vmem:[#allocation5 + $0xc0] sm:$0xff]
    %v71 = vld [vmem:[#allocation5 + $0xc8] sm:$0xff]
    %v72 = vld [vmem:[#allocation5 + $0xd0] sm:$0xff]
    %v73 = vld [vmem:[#allocation5 + $0xd8] sm:$0xff]
    %v74 = vld [vmem:[#allocation5 + $0xe0] sm:$0xff]
    %v75 = vld [vmem:[#allocation5 + $0xe8] sm:$0xff]
    %v76 = vld [vmem:[#allocation5 + $0xf0] sm:$0xff]
    %v77 = vld [vmem:[#allocation5 + $0xf8] sm:$0xff]
    %v78 = vld [vmem:[#allocation5 + $0x100] sm:$0xff]
    %v79 = vld [vmem:[#allocation5 + $0x108] sm:$0xff]
    %v80 = vld [vmem:[#allocation5 + $0x110] sm:$0xff]
    %v81 = vld [vmem:[#allocation5 + $0x118] sm:$0xff]
    %v82 = vld [vmem:[#allocation5 + $0x120] sm:$0xff]
    %v83 = vld [vmem:[#allocation5 + $0x128] sm:$0xff]
    %v84 = vld [vmem:[#allocation5 + $0x130] sm:$0xff]
    %v85 = vld [vmem:[#allocation5 + $0x138] sm:$0xff]
    %v86 = vld [vmem:[#allocation5 + $0x140] sm:$0xff]
    %v87 = vld [vmem:[#allocation5 + $0x148] sm:$0xff]
    %v88 = vld [vmem:[#allocation5 + $0x150] sm:$0xff]
    %v89 = vld [vmem:[#allocation5 + $0x158] sm:$0xff]
    %v90 = vld [vmem:[#allocation5 + $0x160] sm:$0xff]
    %v91 = vld [vmem:[#allocation5 + $0x168] sm:$0xff]
    %v92 = vld [vmem:[#allocation5 + $0x170] sm:$0xff]
    %v93 = vld [vmem:[#allocation5 + $0x178] sm:$0xff]
    %94 = vmatprep.subr.mxu0 0.0
    %95 = vmatpush1.msra.mxu0 %v61
    %96 = vmatprep.subr.mxu0 0.0
    %97 = vmatpush1.msra.mxu0 %v60
    %98 = vmatprep.subr.mxu0 0.0
    %99 = vmatpush1.msra.mxu0 %v59
    %100 = vmatprep.subr.mxu0 0.0
    %101 = vmatpush1.msra.mxu0 %v58
    %102 = vmatprep.subr.mxu0 0.0
    %103 = vmatpush1.msra.mxu0 %v57
    %104 = vmatprep.subr.mxu0 0.0
    %105 = vmatpush1.msra.mxu0 %v56
    %106 = vmatprep.subr.mxu0 0.0
    %107 = vmatpush1.msra.mxu0 %v55
    %108 = vmatprep.subr.mxu0 0.0
    %109 = vmatpush1.msra.mxu0 %v54
    %110 = vmatprep.subr.mxu0 0.0
    %111 = vmatpush1.msra.mxu0 %v53
    %112 = vmatprep.subr.mxu0 0.0
    %113 = vmatpush1.msra.mxu0 %v52
    %114 = vmatprep.subr.mxu0 0.0
    %115 = vmatpush1.msra.mxu0 %v51
    %116 = vmatprep.subr.mxu0 0.0
    %117 = vmatpush1.msra.mxu0 %v50
    %118 = vmatprep.subr.mxu0 0.0
    %119 = vmatpush1.msra.mxu0 %v49
    %120 = vmatprep.subr.mxu0 0.0
    %121 = vmatpush1.msra.mxu0 %v48
    %122 = vmatprep.subr.mxu0 0.0
    %123 = vmatpush1.msra.mxu0 %v47
    %124 = vmatprep.subr.mxu0 0.0
    %125 = vmatpush1.msra.mxu0 %v46
    %126 = vmatprep.subr.mxu0 0.0
    %127 = vmatpush2.msra.mxu0 %v77
    %128 = vmatprep.subr.mxu0 0.0
    %129 = vmatpush2.msra.mxu0 %v76
    %130 = vmatprep.subr.mxu0 0.0
    %131 = vmatpush2.msra.mxu0 %v75
    %132 = vmatprep.subr.mxu0 0.0
    %133 = vmatpush2.msra.mxu0 %v74
    %134 = vmatprep.subr.mxu0 0.0
    %135 = vmatpush2.msra.mxu0 %v73
    %136 = vmatprep.subr.mxu0 0.0
    %137 = vmatpush2.msra.mxu0 %v72
    %138 = vmatprep.subr.mxu0 0.0
    %139 = vmatpush2.msra.mxu0 %v71
    %140 = vmatprep.subr.mxu0 0.0
    %141 = vmatpush2.msra.mxu0 %v70
    %142 = vmatprep.subr.mxu0 0.0
    %143 = vmatpush2.msra.mxu0 %v69
    %144 = vmatprep.subr.mxu0 0.0
    %145 = vmatpush2.msra.mxu0 %v68
    %146 = vmatprep.subr.mxu0 0.0
    %147 = vmatpush2.msra.mxu0 %v67
    %148 = vmatprep.subr.mxu0 0.0
    %149 = vmatpush2.msra.mxu0 %v66
    %150 = vmatprep.subr.mxu0 0.0
    %151 = vmatpush2.msra.mxu0 %v65
    %152 = vmatprep.subr.mxu0 0.0
    %153 = vmatpush2.msra.mxu0 %v64
    %154 = vmatprep.subr.mxu0 0.0
    %155 = vmatpush2.msra.mxu0 %v63
    %156 = vmatprep.subr.mxu0 0.0
    %157 = vmatpush2.msra.mxu0 %v62
    %158 = vmatprep.mubr.f32.mxu0 %v41
    %159 = vmatmul.mubr.f32.gmra.mxu0 %v40
    %v160 = vpop.f32.mrf.mxu0
    %v161 = vadd.f32 0.0, %v160
    %v162 = vpop.f32.mrf.mxu0
    %163 = vmatprep.mubr.f32.mxu0 %v44
    %164 = vmatmul.mubr.f32.gmra.mxu0 %v43
    %v165 = vpop.f32.mrf.mxu0
    %v166 = vadd.f32 0.0, %v165
    %v167 = vpop.f32.mrf.mxu0
    %168 = vdwg.mxu0
    %169 = vmatprep.subr.mxu0 0.0
    %170 = vmatpush1.msra.mxu0 %v93
    %171 = vmatprep.subr.mxu0 0.0
    %172 = vmatpush1.msra.mxu0 %v92
    %173 = vmatprep.subr.mxu0 0.0
    %174 = vmatpush1.msra.mxu0 %v91
    %175 = vmatprep.subr.mxu0 0.0
    %176 = vmatpush1.msra.mxu0 %v90
    %177 = vmatprep.subr.mxu0 0.0
    %178 = vmatpush1.msra.mxu0 %v89
    %179 = vmatprep.subr.mxu0 0.0
    %180 = vmatpush1.msra.mxu0 %v88
    %181 = vmatprep.subr.mxu0 0.0
    %182 = vmatpush1.msra.mxu0 %v87
    %183 = vmatprep.subr.mxu0 0.0
    %184 = vmatpush1.msra.mxu0 %v86
    %185 = vmatprep.subr.mxu0 0.0
    %186 = vmatpush1.msra.mxu0 %v85
    %187 = vmatprep.subr.mxu0 0.0
    %188 = vmatpush1.msra.mxu0 %v84
    %189 = vmatprep.subr.mxu0 0.0
    %190 = vmatpush1.msra.mxu0 %v83
    %191 = vmatprep.subr.mxu0 0.0
    %192 = vmatpush1.msra.mxu0 %v82
    %193 = vmatprep.subr.mxu0 0.0
    %194 = vmatpush1.msra.mxu0 %v81
    %195 = vmatprep.subr.mxu0 0.0
    %196 = vmatpush1.msra.mxu0 %v80
    %197 = vmatprep.subr.mxu0 0.0
    %198 = vmatpush1.msra.mxu0 %v79
    %199 = vmatprep.subr.mxu0 0.0
    %200 = vmatpush1.msra.mxu0 %v78
    %201 = vmatprep.subr.mxu0 0.0
    %202 = vmatpush2.msra.mxu0 0.0
    %203 = vmatprep.subr.mxu0 0.0
    %204 = vmatpush2.msra.mxu0 0.0
    %205 = vmatprep.subr.mxu0 0.0
    %206 = vmatpush2.msra.mxu0 0.0
    %207 = vmatprep.subr.mxu0 0.0
    %208 = vmatpush2.msra.mxu0 0.0
    %209 = vmatprep.subr.mxu0 0.0
    %210 = vmatpush2.msra.mxu0 0.0
    %211 = vmatprep.subr.mxu0 0.0
    %212 = vmatpush2.msra.mxu0 0.0
    %213 = vmatprep.subr.mxu0 0.0
    %214 = vmatpush2.msra.mxu0 0.0
    %215 = vmatprep.subr.mxu0 0.0
    %216 = vmatpush2.msra.mxu0 0.0
    %217 = vmatprep.subr.mxu0 0.0
    %218 = vmatpush2.msra.mxu0 0.0
    %219 = vmatprep.subr.mxu0 0.0
    %220 = vmatpush2.msra.mxu0 0.0
    %221 = vmatprep.subr.mxu0 0.0
    %222 = vmatpush2.msra.mxu0 0.0
    %223 = vmatprep.subr.mxu0 0.0
    %224 = vmatpush2.msra.mxu0 0.0
    %225 = vmatprep.subr.mxu0 0.0
    %226 = vmatpush2.msra.mxu0 0.0
    %227 = vmatprep.subr.mxu0 0.0
    %228 = vmatpush2.msra.mxu0 0.0
    %229 = vmatprep.subr.mxu0 0.0
    %230 = vmatpush2.msra.mxu0 0.0
    %231 = vmatprep.subr.mxu0 0.0
    %232 = vmatpush2.msra.mxu0 0.0
    %233 = vmatprep.mubr.f32.mxu0 0.0
    %234 = vmatmul.mubr.f32.gmra.mxu0 %v42
    %v235 = vpop.f32.mrf.mxu0
    %v236 = vadd.f32 %v161, %v235
    %v237 = vpop.f32.mrf.mxu0
    %238 = vmatprep.mubr.f32.mxu0 0.0
    %239 = vmatmul.mubr.f32.gmra.mxu0 %v45
    %v240 = vpop.f32.mrf.mxu0
    %v241 = vadd.f32 %v166, %v240
    %v242 = vpop.f32.mrf.mxu0
    %243 = vdwg.mxu0
    %244 = vst [vmem:[#allocation7] sm:$0xff] %v236
    %245 = vst [vmem:[#allocation7 + $0x8] sm:$0xff] %v241
    // Predicated region
    $region18: #{tpu_custom_call.1} parent=1 // pred_check
      _
    $region19: #{tpu_custom_call.1} parent=1 // pred_check_branch
      %247 = sbr.rel (0) target = $region21
    $region20: #{tpu_custom_call.1} parent=1 // pred_region
      %s249 = ssub.s32 256, 256
      %250 = vsyncadd [#allocation4], %s249
      %s251 = sshll.u32 [#allocation7], 4
      %s252 = int_to_ptr.vmem [resolvable:$true] %s251
      %257 = dma.vmem_to_hbm [thread:$0]  %s252, 256, %s2, [#allocation4], 128, 128, 8
    $region21: #{tpu_custom_call.1} parent=1 // pred_fallthru
      _
    // Predicated region
    $region22: #{tpu_custom_call.1} parent=1 // pred_check
      _
    $region23: #{tpu_custom_call.1} parent=1 // pred_check_branch
      %259 = sbr.rel (0) target = $region25
    $region24: #{tpu_custom_call.1} parent=1 // pred_region
      %260 = dma.done [#allocation4], 256
    $region25: #{tpu_custom_call.1} parent=1 // pred_fallthru
      _
    %261 = vsyncpa [#allocation3], 1
    %262 = vsyncpa [#allocation6], 1
    %263 = vsyncpa [#allocation4], 1

</llo_original>
